<compile_context>
chip_gen: v6e
topology: v6e:2x2x1
jax: 0.10.0
libtpu: 0.0.40
codegen_flags: <defaults>
</compile_context>

<pallas_src>
import functools
import math

import jax
import jax.numpy as jnp
from jax import lax
from jax.experimental import pallas as pl
from jax.experimental.pallas import tpu as pltpu


def _round_up(x, m):
    return ((x + m - 1) // m) * m


# ---------------------------------------------------------------------------
# Kernel 1: tiled linear  o = x @ w_t + b     (w_t is pre-transposed: (K, N))
# ---------------------------------------------------------------------------
def _linear_kernel(x_ref, w_ref, b_ref, o_ref, acc_ref):
    @pl.when(pl.program_id(2) == 0)
    def _():
        acc_ref[...] = jnp.zeros_like(acc_ref)

    acc_ref[...] += jnp.dot(x_ref[...], w_ref[...],
                            preferred_element_type=jnp.float32)

    @pl.when(pl.program_id(2) == pl.num_programs(2) - 1)
    def _():
        o_ref[...] = (acc_ref[...] + b_ref[...]).astype(o_ref.dtype)


def pallas_linear(x, w_t, b, *, out_dtype=jnp.float32, tm=256, tn=256, tk=512):
    """nn.Linear semantics with pre-transposed weight: out = x @ w_t + b."""
    M, K = x.shape
    Kw, N = w_t.shape
    assert K == Kw
    # Full-dim blocks when small (8/128 escape hatch), MXU-aligned tiles otherwise.
    bm = M if M <= tm else tm
    bn = N if N <= tn else tn
    bk = K if K <= tk else tk
    Mp, Np, Kp = _round_up(M, bm), _round_up(N, bn), _round_up(K, bk)

    xb = x.astype(jnp.bfloat16)
    wb = w_t.astype(jnp.bfloat16)
    bb = b.reshape(1, N).astype(jnp.float32)
    if (Mp, Kp) != (M, K):
        xb = jnp.pad(xb, ((0, Mp - M), (0, Kp - K)))
    if (Kp, Np) != (K, N):
        wb = jnp.pad(wb, ((0, Kp - K), (0, Np - N)))
    if Np != N:
        bb = jnp.pad(bb, ((0, 0), (0, Np - N)))

    out = pl.pallas_call(
        _linear_kernel,
        out_shape=jax.ShapeDtypeStruct((Mp, Np), out_dtype),
        grid_spec=pltpu.PrefetchScalarGridSpec(
            num_scalar_prefetch=0,
            grid=(Mp // bm, Np // bn, Kp // bk),
            in_specs=[
                pl.BlockSpec((bm, bk), lambda i, j, k: (i, k)),
                pl.BlockSpec((bk, bn), lambda i, j, k: (k, j)),
                pl.BlockSpec((1, bn), lambda i, j, k: (0, j)),
            ],
            out_specs=pl.BlockSpec((bm, bn), lambda i, j, k: (i, j)),
            scratch_shapes=[pltpu.VMEM((bm, bn), jnp.float32)],
        ),
        compiler_params=pltpu.CompilerParams(
            dimension_semantics=("parallel", "parallel", "arbitrary"),
            vmem_limit_bytes=64 * 1024 * 1024,
        ),
    )(xb, wb, bb)
    if (Mp, Np) != (M, N):
        out = out[:M, :N]
    return out


# ---------------------------------------------------------------------------
# Kernel 2: multi-head attention, one batch (all heads) per grid step.
#   qkv layout: (B, S, 3H) with the 1/sqrt(head_dim) scale already folded into Q.
# ---------------------------------------------------------------------------
def _attention_kernel(qkv_ref, o_ref, *maybe_p_ref, num_head, head_dim, with_probs):
    p_ref = maybe_p_ref[0] if with_probs else None
    hidden = num_head * head_dim
    qkv = qkv_ref[0]                                        # (S, 3H) bf16
    for h in range(num_head):                               # static unroll over heads
        lo = h * head_dim
        qh = qkv[:, lo:lo + head_dim]
        kh = qkv[:, hidden + lo:hidden + lo + head_dim]
        vh = qkv[:, 2 * hidden + lo:2 * hidden + lo + head_dim]
        # q @ k^T without materializing a transpose (contract last dims).
        s = lax.dot_general(qh, kh, (((1,), (1,)), ((), ())),
                            preferred_element_type=jnp.float32)      # (S, S) f32
        s = s - jnp.max(s, axis=-1, keepdims=True)
        e = jnp.exp(s)
        probs = e * pl.reciprocal(jnp.sum(e, axis=-1, keepdims=True), approx=True)
        if with_probs:
            p_ref[0, h] = probs
        ctx = jnp.dot(probs.astype(qkv.dtype), vh,
                      preferred_element_type=jnp.float32)            # (S, D) f32
        o_ref[0, :, lo:lo + head_dim] = ctx.astype(o_ref.dtype)


def pallas_attention(qkv, num_head, head_dim, *, return_probs=False,
                     out_dtype=jnp.bfloat16):
    B, S, H3 = qkv.shape
    hidden = num_head * head_dim
    assert H3 == 3 * hidden
    kernel = functools.partial(_attention_kernel, num_head=num_head,
                               head_dim=head_dim, with_probs=return_probs)
    if return_probs:
        out_shape = (jax.ShapeDtypeStruct((B, S, hidden), out_dtype),
                     jax.ShapeDtypeStruct((B, num_head, S, S), jnp.float32))
        out_specs = (pl.BlockSpec((1, S, hidden), lambda b: (b, 0, 0)),
                     pl.BlockSpec((1, num_head, S, S), lambda b: (b, 0, 0, 0)))
    else:
        out_shape = jax.ShapeDtypeStruct((B, S, hidden), out_dtype)
        out_specs = pl.BlockSpec((1, S, hidden), lambda b: (b, 0, 0))

    res = pl.pallas_call(
        kernel,
        out_shape=out_shape,
        grid=(B,),
        in_specs=[pl.BlockSpec((1, S, H3), lambda b: (b, 0, 0))],
        out_specs=out_specs,
        compiler_params=pltpu.CompilerParams(
            dimension_semantics=("parallel",),
            vmem_limit_bytes=64 * 1024 * 1024,
        ),
    )(qkv)
    if return_probs:
        return res[0], res[1]
    return res, None


# ---------------------------------------------------------------------------
# Kernel 3: fused residual add + LayerNorm (row-wise)
# ---------------------------------------------------------------------------
def _add_layernorm_kernel(x_ref, y_ref, g_ref, b_ref, o_ref, *, eps):
    s = x_ref[...] + y_ref[...]
    mu = jnp.mean(s, axis=-1, keepdims=True)
    d = s - mu
    var = jnp.mean(d * d, axis=-1, keepdims=True)
    o_ref[...] = d * lax.rsqrt(var + eps) * g_ref[...] + b_ref[...]


def pallas_add_layernorm(x, y, gamma, beta, *, eps=1e-5, tm=512):
    M, H = x.shape
    bm = M if M <= tm else tm
    Mp = _round_up(M, bm)
    xf = x.astype(jnp.float32)
    yf = y.astype(jnp.float32)
    if Mp != M:
        xf = jnp.pad(xf, ((0, Mp - M), (0, 0)))
        yf = jnp.pad(yf, ((0, Mp - M), (0, 0)))
    out = pl.pallas_call(
        functools.partial(_add_layernorm_kernel, eps=eps),
        out_shape=jax.ShapeDtypeStruct((Mp, H), jnp.float32),
        grid=(Mp // bm,),
        in_specs=[
            pl.BlockSpec((bm, H), lambda i: (i, 0)),
            pl.BlockSpec((bm, H), lambda i: (i, 0)),
            pl.BlockSpec((1, H), lambda i: (0, 0)),
            pl.BlockSpec((1, H), lambda i: (0, 0)),
        ],
        out_specs=pl.BlockSpec((bm, H), lambda i: (i, 0)),
        compiler_params=pltpu.CompilerParams(
            dimension_semantics=("parallel",),
            vmem_limit_bytes=64 * 1024 * 1024,
        ),
    )(xf, yf, gamma.reshape(1, H).astype(jnp.float32),
      beta.reshape(1, H).astype(jnp.float32))
    if Mp != M:
        out = out[:M]
    return out


# ---------------------------------------------------------------------------
# Module wrappers
# ---------------------------------------------------------------------------
class MultiHeadedAttentionPallas:
    """MultiHeadedAttention (GlobalAttention path, atten_window_size=None).
    Dropout is treated as identity (inference); mask must be None."""

    def __init__(self, num_head, hidden_dim, rng_key, dropout=0.0):
        assert hidden_dim % num_head == 0
        self.num_head = num_head
        self.hidden_dim = hidden_dim
        self.head_dim = hidden_dim // num_head

        keys = jax.random.split(rng_key, 6)
        std = math.sqrt(2.0 / (hidden_dim + hidden_dim))   # xavier_normal_
        bb = 1.0 / math.sqrt(hidden_dim)                   # nn.Linear bias default

        def w(k):
            return std * jax.random.normal(k, (hidden_dim, hidden_dim), jnp.float32)

        def b(k):
            return jax.random.uniform(k, (hidden_dim,), jnp.float32, -bb, bb)

        self.wq, self.wk, self.wv = w(keys[0]), w(keys[1]), w(keys[2])
        self.bq, self.bk, self.bv = b(keys[3]), b(keys[4]), b(keys[5])

        # Fused, pre-transposed QKV weight (H, 3H); 1/sqrt(head_dim) folded into Q.
        scale = 1.0 / math.sqrt(self.head_dim)
        self.w_qkv_t = jnp.concatenate(
            [self.wq.T * scale, self.wk.T, self.wv.T], axis=1)
        self.b_qkv = jnp.concatenate([self.bq * scale, self.bk, self.bv])

    def _forward_batch_major(self, q_b, k_b=None, v_b=None, *, return_probs=False):
        """Inputs are (B, S, H); returns (context (B,S,H) bf16, probs or None)."""
        B, S, H = q_b.shape
        if k_b is None and v_b is None:
            # Self-attention fast path: one fused QKV matmul, x read once.
            qkv = pallas_linear(q_b.reshape(B * S, H), self.w_qkv_t, self.b_qkv,
                                out_dtype=jnp.bfloat16)
        else:
            # TODO(synk): cross-attention with differing q/kv sequence lengths
            # is not supported by this fused layout.
            assert k_b.shape == q_b.shape and v_b.shape == q_b.shape
            q = pallas_linear(q_b.reshape(B * S, H), self.w_qkv_t[:, :H],
                              self.b_qkv[:H], out_dtype=jnp.bfloat16)
            k = pallas_linear(k_b.reshape(B * S, H), self.w_qkv_t[:, H:2 * H],
                              self.b_qkv[H:2 * H], out_dtype=jnp.bfloat16)
            v = pallas_linear(v_b.reshape(B * S, H), self.w_qkv_t[:, 2 * H:],
                              self.b_qkv[2 * H:], out_dtype=jnp.bfloat16)
            qkv = jnp.concatenate([q, k, v], axis=-1)
        out, probs = pallas_attention(qkv.reshape(B, S, 3 * H), self.num_head,
                                      self.head_dim, return_probs=return_probs)
        return out, probs

    def __call__(self, query, key, value, mask=None, batch_first=False):
        # TODO(synk): mask path (masked_fill with MIN_SCORE) not implemented.
        assert mask is None
        same = (query is key) and (key is value)
        if not batch_first:
            query = jnp.transpose(query, (1, 0, 2))
            key = query if same else jnp.transpose(key, (1, 0, 2))
            value = query if same else jnp.transpose(value, (1, 0, 2))
        out, probs = self._forward_batch_major(
            query, None if same else key, None if same else value,
            return_probs=True)
        out = out.astype(jnp.float32)
        if not batch_first:
            out = jnp.transpose(out, (1, 0, 2))
        return out, probs


class TransformerLayerPallas:
    """TransformerLayer forward (inference): self-attention -> output_linear ->
    residual add -> LayerNorm. Dropout layers are identity at inference.
    TODO(synk): PositionwiseFeedForward is not defined in the spec, so the layer
    returns the post-LayerNorm tensor (the ffn input)."""

    def __init__(self, size, num_heads, rng_key, dropout=0.1):
        k_attn, k_w, k_b = jax.random.split(rng_key, 3)
        self.size = size
        self.atten = MultiHeadedAttentionPallas(num_heads, size, k_attn,
                                                dropout=dropout)
        bound = 1.0 / math.sqrt(size)
        self.w_out = jax.random.uniform(k_w, (size, size), jnp.float32, -bound, bound)
        self.b_out = jax.random.uniform(k_b, (size,), jnp.float32, -bound, bound)
        self.w_out_t = self.w_out.T            # pre-transposed once
        self.ln_gamma = jnp.ones((size,), jnp.float32)
        self.ln_beta = jnp.zeros((size,), jnp.float32)
        self.ln_eps = 1e-5

    def __call__(self, x, mask=None, batch_first=False, return_attn=False):
        # TODO(synk): mask path (masked_fill with MIN_SCORE) not implemented.
        assert mask is None
        xb = x if batch_first else jnp.transpose(x, (1, 0, 2))   # (B, S, H)
        B, S, H = xb.shape
        ctx, probs = self.atten._forward_batch_major(xb, return_probs=return_attn)
        proj = pallas_linear(ctx.reshape(B * S, H), self.w_out_t, self.b_out,
                             out_dtype=jnp.float32)
        y = pallas_add_layernorm(xb.reshape(B * S, H), proj,
                                 self.ln_gamma, self.ln_beta, eps=self.ln_eps)
        y = y.reshape(B, S, H)
        if not batch_first:
            y = jnp.transpose(y, (1, 0, 2))
        return (y, probs) if return_attn else y


# ---------------------------------------------------------------------------
# Pure-JAX f32 reference (mirrors the PyTorch forward at inference)
# ---------------------------------------------------------------------------
def reference_transformer_layer(layer, x):
    att = layer.atten
    xb = jnp.transpose(x, (1, 0, 2))           # (B, S, H)
    B, S, H = xb.shape

    def proj(t, w, b):
        return t @ w.T + b

    def split(t):
        return jnp.transpose(t.reshape(B, S, att.num_head, att.head_dim),
                             (0, 2, 1, 3))

    q = split(proj(xb, att.wq, att.bq))
    k = split(proj(xb, att.wk, att.bk))
    v = split(proj(xb, att.wv, att.bv))
    scores = jnp.einsum("bhqd,bhkd->bhqk", q, k) / math.sqrt(att.head_dim)
    probs = jax.nn.softmax(scores, axis=-1)
    ctx = jnp.einsum("bhqk,bhkd->bhqd", probs, v)
    ctx = jnp.transpose(ctx, (0, 2, 1, 3)).reshape(B, S, H)
    out = proj(ctx, layer.w_out, layer.b_out)
    s = xb + out
    mu = jnp.mean(s, axis=-1, keepdims=True)
    var = jnp.mean(jnp.square(s - mu), axis=-1, keepdims=True)
    y = (s - mu) / jnp.sqrt(var + layer.ln_eps) * layer.ln_gamma + layer.ln_beta
    return jnp.transpose(y, (1, 0, 2)), probs


if __name__ == "__main__":
    root = jax.random.PRNGKey(0)
    k_mod, k_x = jax.random.split(root)

    size, num_heads = 32, 4
    seq_len, batch = 8, 2

    layer = TransformerLayerPallas(size, num_heads, k_mod, dropout=0.1)
    # batch_first=False layout: (seq, batch, hidden)
    x = jax.random.normal(k_x, (seq_len, batch, size), jnp.float32)

    y, attn = layer(x, mask=None, batch_first=False, return_attn=True)
    y = jax.block_until_ready(y)
    attn = jax.block_until_ready(attn)

    ref_y, ref_attn = reference_transformer_layer(layer, x)

    assert y.shape == (seq_len, batch, size)
    assert attn.shape == (batch, num_heads, seq_len, seq_len)
    # bf16 MXU inputs + approx reciprocal -> loose tolerance vs. the f32 reference.
    assert jnp.allclose(attn, ref_attn, atol=5e-2, rtol=5e-2), \
        float(jnp.max(jnp.abs(attn - ref_attn)))
    assert jnp.allclose(y, ref_y, atol=5e-2, rtol=5e-2), \
        float(jnp.max(jnp.abs(y - ref_y)))

    print("KERNEL_OK")
</pallas_src>

<mosaic_0001>
module attributes {stable_mosaic.version = 11 : i64} {
  func.func @_linear_kernel(%arg0: i32, %arg1: i32, %arg2: i32, %arg3: memref<16x32xbf16, #tpu.memory_space<vmem>>, %arg4: memref<32x96xbf16, #tpu.memory_space<vmem>>, %arg5: memref<1x96xf32, #tpu.memory_space<vmem>>, %arg6: memref<16x96xbf16, #tpu.memory_space<vmem>>, %arg7: memref<16x96xf32, #tpu.memory_space<vmem>>) attributes {dimension_semantics = [#tpu.dimension_semantics<parallel>, #tpu.dimension_semantics<parallel>, #tpu.dimension_semantics<arbitrary>], iteration_bounds = array<i64: 1, 1, 1>, scalar_prefetch = 0 : i64, scratch_operands = 1 : i64, tpu.core_type = #tpu.core_type<tc>, window_params = [{transform_indices = @transform_0, window_bounds = array<i64: 16, 32>}, {transform_indices = @transform_1, window_bounds = array<i64: 32, 96>}, {transform_indices = @transform_2, window_bounds = array<i64: 1, 96>}, {transform_indices = @transform_3, window_bounds = array<i64: 16, 96>}]} {
    %c0_i32 = arith.constant 0 : i32
    %0 = arith.cmpi eq, %arg2, %c0_i32 : i32
    %1 = arith.extui %0 : i1 to i32
    %c0_i32_0 = arith.constant 0 : i32
    %2 = arith.cmpi ne, %1, %c0_i32_0 : i32
    scf.if %2 {
      %cst_10 = arith.constant 0.000000e+00 : f32
      %12 = vector.broadcast %cst_10 : f32 to vector<16x96xf32>
      %c0_11 = arith.constant 0 : index
      %c0_12 = arith.constant 0 : index
      %13 = vector.load %arg7[%c0_11, %c0_12] : memref<16x96xf32, #tpu.memory_space<vmem>>, vector<16x96xf32>
      tpu.vector_store %arg7[%c0_11, %c0_12], %12 {strides = array<i32>} : memref<16x96xf32, #tpu.memory_space<vmem>>, vector<16x96xf32>,
    } else {
    }
    %c0 = arith.constant 0 : index
    %c0_1 = arith.constant 0 : index
    %3 = vector.load %arg7[%c0, %c0_1] : memref<16x96xf32, #tpu.memory_space<vmem>>, vector<16x96xf32>
    %c0_2 = arith.constant 0 : index
    %c0_3 = arith.constant 0 : index
    %4 = vector.load %arg3[%c0_2, %c0_3] : memref<16x32xbf16, #tpu.memory_space<vmem>>, vector<16x32xbf16>
    %c0_4 = arith.constant 0 : index
    %c0_5 = arith.constant 0 : index
    %5 = vector.load %arg4[%c0_4, %c0_5] : memref<32x96xbf16, #tpu.memory_space<vmem>>, vector<32x96xbf16>
    %cst = arith.constant dense<0.000000e+00> : vector<16x96xf32>
    %6 = tpu.matmul %4, %5, %cst {dimension_numbers = #tpu.dot_dimension_numbers<[1], [0], [0], [1], [0, 0, 1, 1], [], []>} : vector<16x32xbf16>, vector<32x96xbf16>, vector<16x96xf32> -> vector<16x96xf32>
    %7 = arith.addf %3, %6 : vector<16x96xf32>
    %c0_6 = arith.constant 0 : index
    %c0_7 = arith.constant 0 : index
    %8 = vector.load %arg7[%c0_6, %c0_7] : memref<16x96xf32, #tpu.memory_space<vmem>>, vector<16x96xf32>
    tpu.vector_store %arg7[%c0_6, %c0_7], %7 {strides = array<i32>} : memref<16x96xf32, #tpu.memory_space<vmem>>, vector<16x96xf32>,
    %c0_i32_8 = arith.constant 0 : i32
    %9 = arith.cmpi eq, %arg2, %c0_i32_8 : i32
    %10 = arith.extui %9 : i1 to i32
    %c0_i32_9 = arith.constant 0 : i32
    %11 = arith.cmpi ne, %10, %c0_i32_9 : i32
    scf.if %11 {
      %c0_10 = arith.constant 0 : index
      %c0_11 = arith.constant 0 : index
      %12 = vector.load %arg7[%c0_10, %c0_11] : memref<16x96xf32, #tpu.memory_space<vmem>>, vector<16x96xf32>
      %c0_12 = arith.constant 0 : index
      %c0_13 = arith.constant 0 : index
      %13 = vector.load %arg5[%c0_12, %c0_13] : memref<1x96xf32, #tpu.memory_space<vmem>>, vector<1x96xf32>
      %14 = vector.broadcast %13 : vector<1x96xf32> to vector<16x96xf32>
      %15 = arith.addf %12, %14 : vector<16x96xf32>
      %16 = arith.truncf %15 : vector<16x96xf32> to vector<16x96xbf16>
      %c0_14 = arith.constant 0 : index
      %c0_15 = arith.constant 0 : index
      %17 = vector.load %arg6[%c0_14, %c0_15] : memref<16x96xbf16, #tpu.memory_space<vmem>>, vector<16x96xbf16>
      tpu.vector_store %arg6[%c0_14, %c0_15], %16 {strides = array<i32>} : memref<16x96xbf16, #tpu.memory_space<vmem>>, vector<16x96xbf16>,
    } else {
    }
    return
  }
  func.func @transform_0(%arg0: i32, %arg1: i32, %arg2: i32) -> (i32, i32) {
    %c0_i32 = arith.constant 0 : i32
    return %arg0, %arg2 : i32, i32
  }
  func.func @transform_1(%arg0: i32, %arg1: i32, %arg2: i32) -> (i32, i32) {
    %c0_i32 = arith.constant 0 : i32
    return %arg2, %arg1 : i32, i32
  }
  func.func @transform_2(%arg0: i32, %arg1: i32, %arg2: i32) -> (i32, i32) {
    %c0_i32 = arith.constant 0 : i32
    %c0_i32_0 = arith.constant 0 : i32
    return %c0_i32, %arg1 : i32, i32
  }
  func.func @transform_3(%arg0: i32, %arg1: i32, %arg2: i32) -> (i32, i32) {
    %c0_i32 = arith.constant 0 : i32
    return %arg0, %arg1 : i32, i32
  }
}

</mosaic_0001>

<llo_original>
// kernel: tpu_custom_call.1
$region0: #{tpu_custom_call.1}
  #allocation0 [shape = 'u32[]', space=smem, size = 0x4, offset = 0x4, fixed_abs, tag = 'smem constant byte address 0x4 - core index']
  #allocation1 [shape = 'u32[144,128]{1,0:T(1,128)}', space=vmem, size = 0x12000, scoped, tag = 'internal scratch']
  #allocation2 [shape = 'f32[16,96]{1,0:T(8,128)}', space=vmem, size = 0x2000, scoped, tag = 'scratch operand']
  %s0 = inlined_call_operand.hbm [shape: bf16[16,32], index: 0, kind: input, shape index: {}]
  %s1 = inlined_call_operand.hbm [shape: bf16[32,96], index: 1, kind: input, shape index: {}]
  %s2 = inlined_call_operand.vmem [shape: f32[1,96], index: 2, kind: input, shape index: {}]
  %s3 = inlined_call_operand.hbm [shape: bf16[16,96], index: 3, kind: output, shape index: {}]
  %s4 = sld [smem:[#allocation0]]
  $region38: #{tpu_custom_call.1} parent=0
    _
  %s6 = ssub.s32 1, %s4
  %s7 = scalar_select 0, %s6, %s4
  $region1: #{tpu_custom_call.1} parent=0
    #allocation3 [shape = 'u8[4096]{0}', space=vmem, size = 0x1000, scoped, tag = 'input window, operand 0, single buffered']
    #allocation4 [shape = 's32[1]{0}', space=sflag, size = 0x4, scoped, tag = 'scoped memory for tpu_custom_call.1']
    #allocation5 [shape = 's32[1]{0}', space=sflag, size = 0x4, scoped, tag = 'scoped memory for tpu_custom_call.1']
    #allocation6 [shape = 'u8[8192]{0}', space=vmem, size = 0x2000, scoped, tag = 'input window, operand 1, single buffered']
    #allocation7 [shape = 's32[1]{0}', space=sflag, size = 0x4, scoped, tag = 'scoped memory for tpu_custom_call.1']
    #allocation8 [shape = 'u8[4096]{0}', space=vmem, size = 0x1000, scoped, tag = 'output window, operand 0, single buffered']
    %8 = vsyncpa [#allocation4], 0
    %9 = vsyncpa [#allocation7], 0
    %10 = vsyncpa [#allocation5], 0
    // Predicated region
    $region2: #{tpu_custom_call.1} parent=1 // pred_check
      _
    $region3: #{tpu_custom_call.1} parent=1 // pred_check_branch
      %12 = sbr.rel (0) target = $region5
    $region4: #{tpu_custom_call.1} parent=1 // pred_region
      %s14 = ssub.s32 128, 128
      %15 = vsyncadd [#allocation4], %s14
      %s16 = sshll.u32 [#allocation3], 4
      %s17 = int_to_ptr.vmem [resolvable:$true] %s16
      %22 = dma.hbm_to_vmem [thread:$0]  %s0, 128, %s17, [#allocation4], 64, 64, 4
    $region5: #{tpu_custom_call.1} parent=1 // pred_fallthru
      _
    // Predicated region
    $region6: #{tpu_custom_call.1} parent=1 // pred_check
      _
    $region7: #{tpu_custom_call.1} parent=1 // pred_check_branch
      %24 = sbr.rel (0) target = $region9
    $region8: #{tpu_custom_call.1} parent=1 // pred_region
      %s26 = ssub.s32 256, 256
      %27 = vsyncadd [#allocation7], %s26
      %s28 = sshll.u32 [#allocation6], 4
      %s29 = int_to_ptr.vmem [resolvable:$true] %s28
      %34 = dma.hbm_to_vmem [thread:$0]  %s1, 256, %s29, [#allocation7], 64, 64, 4
    $region9: #{tpu_custom_call.1} parent=1 // pred_fallthru
      _
    // Predicated region
    $region10: #{tpu_custom_call.1} parent=1 // pred_check
      _
    $region11: #{tpu_custom_call.1} parent=1 // pred_check_branch
      %36 = sbr.rel (0) target = $region13
    $region12: #{tpu_custom_call.1} parent=1 // pred_region
      _
    $region13: #{tpu_custom_call.1} parent=1 // pred_fallthru
      _
    // Predicated region
    $region14: #{tpu_custom_call.1} parent=1 // pred_check
      _
    $region15: #{tpu_custom_call.1} parent=1 // pred_check_branch
      %38 = sbr.rel (0) target = $region17
    $region16: #{tpu_custom_call.1} parent=1 // pred_region
      %39 = dma.done [#allocation4], 128
    $region17: #{tpu_custom_call.1} parent=1 // pred_fallthru
      _
    // Predicated region
    $region18: #{tpu_custom_call.1} parent=1 // pred_check
      _
    $region19: #{tpu_custom_call.1} parent=1 // pred_check_branch
      %41 = sbr.rel (0) target = $region21
    $region20: #{tpu_custom_call.1} parent=1 // pred_region
      %42 = dma.done [#allocation7], 256
    $region21: #{tpu_custom_call.1} parent=1 // pred_fallthru
      _
    %p44 = scmp.eq.s32.totalorder 0, 0
    // Predicated region
    $region22: #{tpu_custom_call.1} parent=1 // pred_check
      %p45 = pneg %p44
    $region23: #{tpu_custom_call.1} parent=1 // pred_check_branch
      %47 = sbr.rel (%p45) target = $region25
    $region24: #{tpu_custom_call.1} parent=1 // pred_region
      %vm48 = vcmask 785408
      %49 = vst.msk [vmem:[#allocation2] sm:$0xff] %vm48, 0.0
      %50 = vst.msk [vmem:[#allocation2 + $0x8] sm:$0xff] %vm48, 0.0
    $region25: #{tpu_custom_call.1} parent=1 // pred_fallthru
      _
    %v51 = vld [vmem:[#allocation2] sm:$0xff]
    %v52 = vld [vmem:[#allocation2 + $0x8] sm:$0xff]
    %v53 = vld [vmem:[#allocation3] sm:$0xf]
    %v54 = vld [vmem:[#allocation3 + $0x4] sm:$0xf]
    %v55 = vld [vmem:[#allocation6] sm:$0xf]
    %v56 = vld [vmem:[#allocation6 + $0x4] sm:$0xf]
    %v57 = vld [vmem:[#allocation6 + $0x8] sm:$0xf]
    %v58 = vld [vmem:[#allocation6 + $0xc] sm:$0xf]
    %v61 = vunpack.c.l.b16 %v53
    %v62 = vunpack.c.l.b16 %v54
    %v63 = vpack.c.b16 %v62, %v61
    %v68 = vunpack.c.l.b16 %v55
    %v69 = vunpack.c.l.b16 %v56
    %v70 = vunpack.c.l.b16 %v57
    %v71 = vunpack.c.l.b16 %v58
    %v72 = vpack.c.b16 %v69, %v68
    %v73 = vpack.c.b16 %v71, %v70
    %vm76 = vcmask 261120
    %v78 = vsel %vm76, %v63, 0
    %80 = vmatprep.subr.bf16.mxu0 0
    %81 = vmatpush1.bf16.msra.mxu0 0
    %82 = vmatprep.subr.bf16.mxu0 0
    %83 = vmatpush1.bf16.msra.mxu0 0
    %84 = vmatprep.subr.bf16.mxu0 0
    %85 = vmatpush1.bf16.msra.mxu0 0
    %86 = vmatprep.subr.bf16.mxu0 0
    %87 = vmatpush1.bf16.msra.mxu0 0
    %88 = vmatprep.subr.bf16.mxu0 0
    %89 = vmatpush1.bf16.msra.mxu0 0
    %90 = vmatprep.subr.bf16.mxu0 0
    %91 = vmatpush1.bf16.msra.mxu0 0
    %92 = vmatprep.subr.bf16.mxu0 0
    %93 = vmatpush1.bf16.msra.mxu0 %v73
    %94 = vmatprep.subr.bf16.mxu0 0
    %95 = vmatpush1.bf16.msra.mxu0 %v72
    %96 = vmatprep.subr.bf16.mxu0 0
    %97 = vmatpush2.bf16.msra.mxu0 0
    %98 = vmatprep.subr.bf16.mxu0 0
    %99 = vmatpush2.bf16.msra.mxu0 0
    %100 = vmatprep.subr.bf16.mxu0 0
    %101 = vmatpush2.bf16.msra.mxu0 0
    %102 = vmatprep.subr.bf16.mxu0 0
    %103 = vmatpush2.bf16.msra.mxu0 0
    %104 = vmatprep.subr.bf16.mxu0 0
    %105 = vmatpush2.bf16.msra.mxu0 0
    %106 = vmatprep.subr.bf16.mxu0 0
    %107 = vmatpush2.bf16.msra.mxu0 0
    %108 = vmatprep.subr.bf16.mxu0 0
    %109 = vmatpush2.bf16.msra.mxu0 0
    %110 = vmatprep.subr.bf16.mxu0 0
    %111 = vmatpush2.bf16.msra.mxu0 0
    %112 = vmatprep.mubr.bf16.mxu0 0
    %113 = vmatmul.mubr.bf16.gmra.mxu0 %v78
    %v114 = vpop.f32.mrf.mxu0
    %v115 = vadd.f32 0.0, %v114
    %v116 = vpop.f32.mrf.mxu0
    %v117 = vpop.f32.mrf.mxu0
    %v118 = vadd.f32 0.0, %v117
    %v119 = vpop.f32.mrf.mxu0
    %120 = vdwg.mxu0
    %v121 = vadd.f32 %v51, %v115
    %v122 = vadd.f32 %v52, %v118
    %vm123 = vcmask 785408
    %124 = vst.msk [vmem:[#allocation2] sm:$0xff] %vm123, %v121
    %125 = vst.msk [vmem:[#allocation2 + $0x8] sm:$0xff] %vm123, %v122
    // Predicated region
    $region26: #{tpu_custom_call.1} parent=1 // pred_check
      %p126 = pneg %p44
    $region27: #{tpu_custom_call.1} parent=1 // pred_check_branch
      %128 = sbr.rel (%p126) target = $region29
    $region28: #{tpu_custom_call.1} parent=1 // pred_region
      %v129 = vld [vmem:[#allocation2] sm:$0xff]
      %v130 = vld [vmem:[#allocation2 + $0x8] sm:$0xff]
      %v131 = vld [vmem:[%s2] sm:$0x1]
      %v133 = vlaneseq
      %v134 = vshrl.u32 %v133, 7
      %v135 = vsub.s32 0, %v134
      %v136 = vrot.slane %v131, %v135
      %v138 = vadd.f32 %v129, %v136
      %v139 = vadd.f32 %v130, %v136
      %v140 = vpack.c.bf16 %v139, %v138
      %v142 = vunpack.c.l.b16 %v140
      %v143 = vunpack.c.h.b16 %v140
      %v144 = vpack.c.b16 %v142, %v142
      %v145 = vpack.c.b16 %v143, %v143
      %vm148 = vcmask 781312
      %149 = vst.msk [vmem:[#allocation8] sm:$0xf] %vm148, %v144
      %150 = vst.msk [vmem:[#allocation8 + $0x4] sm:$0xf] %vm148, %v145
    $region29: #{tpu_custom_call.1} parent=1 // pred_fallthru
      _
    // Predicated region
    $region30: #{tpu_custom_call.1} parent=1 // pred_check
      _
    $region31: #{tpu_custom_call.1} parent=1 // pred_check_branch
      %152 = sbr.rel (0) target = $region33
    $region32: #{tpu_custom_call.1} parent=1 // pred_region
      %s154 = ssub.s32 128, 128
      %155 = vsyncadd [#allocation5], %s154
      %s156 = sshll.u32 [#allocation8], 4
      %s157 = int_to_ptr.vmem [resolvable:$true] %s156
      %162 = dma.vmem_to_hbm [thread:$0]  %s157, 128, %s3, [#allocation5], 64, 64, 4
    $region33: #{tpu_custom_call.1} parent=1 // pred_fallthru
      _
    // Predicated region
    $region34: #{tpu_custom_call.1} parent=1 // pred_check
      _
    $region35: #{tpu_custom_call.1} parent=1 // pred_check_branch
      %164 = sbr.rel (0) target = $region37
    $region36: #{tpu_custom_call.1} parent=1 // pred_region
      %165 = dma.done [#allocation5], 128
    $region37: #{tpu_custom_call.1} parent=1 // pred_fallthru
      _
    %166 = vsyncpa [#allocation4], 1
    %167 = vsyncpa [#allocation7], 1
    %168 = vsyncpa [#allocation5], 1

</llo_original>
